<compile_context>
chip_gen: v7x
topology: tpu7x:2x2x1
jax: 0.10.0
libtpu: 0.0.40
codegen_flags: <defaults>
</compile_context>

<pallas_src>
import functools

import jax
import jax.numpy as jnp
from jax.experimental import pallas as pl
from jax.experimental.pallas import tpu as pltpu


def conv1dmax_kernel(x_ref, w_ref, b_ref, o_ref, *, width, h, w, wout, cout, bblk):
    """One block of `bblk` batch elements per grid step.

    x_ref: (bblk, Cin, H*W)   float32  (NCHW with H,W flattened -> lane dense)
    w_ref: (width*Cout, Cin)  float32  (taps stacked along the M axis)
    b_ref: (Cout, 1)          float32
    o_ref: (bblk, Cout, Wout) int32    argmax-over-H indices
    """
    hw = h * w
    hwc = hw - (width - 1)          # number of valid flat conv positions
    w_stk = w_ref[...]              # [width*Cout, Cin]
    bias = b_ref[...]               # [Cout, 1] -> broadcasts over lanes

    # TODO(synk): dropout is implemented in eval mode (identity); training-mode
    # dropout would use pltpu.prng_seed + pltpu.prng_random_bits in-kernel.

    for b in range(bblk):           # static, small
        x_flat = x_ref[b]           # [Cin, H*W]

        # Single MXU call for all taps: M = width*Cout, K = Cin, N = H*W.
        t = jnp.dot(w_stk, x_flat, preferred_element_type=jnp.float32)

        # Shift-and-add the taps on the small matmul output:
        #   acc[co, f] = sum_kw t[kw*Cout + co, f + kw]
        acc = t[0:cout, 0:hwc]
        for kw in range(1, width):
            acc = acc + t[kw * cout:(kw + 1) * cout, kw:kw + hwc]

        acc = jnp.maximum(acc + bias, 0.0)                    # bias + ReLU

        # Pad back to H*W so the flat axis splits exactly into (H, W); padded
        # tail lands at (h = H-1, w >= Wout) which is cropped below.
        if width > 1:
            acc = jnp.concatenate(
                [acc, jnp.zeros((cout, width - 1), jnp.float32)], axis=-1)
        y = acc.reshape(cout, h, w)[:, :, :wout]              # [Cout, H, Wout]

        # argmax over H (first occurrence on ties, as torch.max does).
        # NOTE: NaN handling differs from torch only if NaNs survive ReLU.
        best = jnp.max(y, axis=1, keepdims=True)              # [Cout, 1, Wout]
        hidx = jax.lax.broadcasted_iota(jnp.int32, (cout, h, wout), 1)
        idx = jnp.min(jnp.where(y == best, hidx, h), axis=1)  # [Cout, Wout] int32

        o_ref[b] = idx.astype(jnp.int32)


def _pick_batch_block(n):
    """Largest divisor of n that keeps >= 2 grid steps (v7x has 2 TensorCores)
    while amortizing the per-grid-step overhead."""
    cap = max(1, min(8, n // 2))
    for b in range(cap, 0, -1):
        if n % b == 0:
            return b
    return 1


def conv1d_max(x_nchw, weight, bias, *, batch_block=None):
    """x_nchw : [N, Cin, H, W] float32 (PyTorch layout, used as-is).
    weight : [Cout, Cin, 1, width] float32 (PyTorch Conv2d layout).
    bias   : [Cout] float32.
    Returns int32 argmax-over-H indices of shape [N, Cout, Wout]
    (torch.max returns int64 indices; int32 here)."""
    n, cin, h, w = x_nchw.shape
    cout, cin_w, kh, width = weight.shape
    assert cin_w == cin and kh == 1 and w >= width
    wout = w - width + 1

    if batch_block is None:
        batch_block = _pick_batch_block(n)
    assert n % batch_block == 0
    grid = (n // batch_block,)

    # Free reshape (contiguous merge of the last two NCHW axes) -> lane dense.
    x_flat = x_nchw.reshape(n, cin, h * w)
    # Tiny host-side parameter rearrangements (negligible).
    w_stacked = jnp.transpose(weight[:, :, 0, :], (2, 0, 1)).reshape(width * cout, cin)
    bias2d = bias.reshape(cout, 1)

    kernel = functools.partial(conv1dmax_kernel, width=width, h=h, w=w,
                               wout=wout, cout=cout, bblk=batch_block)

    return pl.pallas_call(
        kernel,
        out_shape=jax.ShapeDtypeStruct((n, cout, wout), jnp.int32),
        grid_spec=pltpu.PrefetchScalarGridSpec(
            num_scalar_prefetch=0,
            grid=grid,
            in_specs=[
                pl.BlockSpec((batch_block, cin, h * w), lambda i: (i, 0, 0)),
                pl.BlockSpec((width * cout, cin), lambda i: (0, 0)),
                pl.BlockSpec((cout, 1), lambda i: (0, 0)),
            ],
            out_specs=pl.BlockSpec((batch_block, cout, wout), lambda i: (i, 0, 0)),
        ),
        # Batch axis is embarrassingly parallel (megacore sharding on v7x).
        compiler_params=pltpu.CompilerParams(
            dimension_semantics=("parallel",)),
    )(x_flat, w_stacked, bias2d)


if __name__ == "__main__":
    key = jax.random.PRNGKey(0)
    k1, k2, k3 = jax.random.split(key, 3)

    N, Cin, H, W = 2, 4, 16, 16
    Cout, WIDTH = 8, 3
    Wout = W - WIDTH + 1

    x = jax.random.normal(k1, (N, Cin, H, W), dtype=jnp.float32)
    weight = 0.1 * jax.random.normal(k2, (Cout, Cin, 1, WIDTH), dtype=jnp.float32)
    bias = 0.1 * jax.random.normal(k3, (Cout,), dtype=jnp.float32)

    out = conv1d_max(x, weight, bias)
    out = jax.block_until_ready(out)

    assert out.shape == (N, Cout, Wout), out.shape
    assert out.dtype == jnp.int32, out.dtype

    # Pure-JAX reference (eval-mode dropout = identity).
    ref_acc = jnp.zeros((N, Cout, H, Wout), jnp.float32)
    for kw in range(WIDTH):
        for ci in range(Cin):
            ref_acc = ref_acc + (weight[:, ci, 0, kw][None, :, None, None]
                                 * x[:, ci, :, kw:kw + Wout][:, None, :, :])
    ref = jnp.argmax(jnp.maximum(ref_acc + bias[None, :, None, None], 0.0),
                     axis=2).astype(jnp.int32)
    match = float(jnp.mean((out == ref).astype(jnp.float32)))
    # Tiny slack for float-rounding-induced argmax tie flips (different sum order).
    assert match >= 0.99, f"mismatch vs reference: match={match}"

    print("KERNEL_OK")
</pallas_src>

<mosaic_0001>
module attributes {stable_mosaic.version = 11 : i64} {
  func.func @conv1dmax_kernel(%arg0: i32, %arg1: memref<1x4x256xf32, #tpu.memory_space<vmem>>, %arg2: memref<24x4xf32, #tpu.memory_space<vmem>>, %arg3: memref<8x1xf32, #tpu.memory_space<vmem>>, %arg4: memref<1x8x14xi32, #tpu.memory_space<vmem>>) attributes {dimension_semantics = [#tpu.dimension_semantics<parallel>], iteration_bounds = array<i64: 2>, scalar_prefetch = 0 : i64, scratch_operands = 0 : i64, tpu.core_type = #tpu.core_type<tc>, window_params = [{transform_indices = @transform_0, window_bounds = array<i64: 1, 4, 256>}, {pipeline_mode = #tpu.pipeline_mode<synchronous>, transform_indices = @transform_1, window_bounds = array<i64: 24, 4>}, {pipeline_mode = #tpu.pipeline_mode<synchronous>, transform_indices = @transform_2, window_bounds = array<i64: 8, 1>}, {transform_indices = @transform_3, window_bounds = array<i64: 1, 8, 14>}]} {
    %c0 = arith.constant 0 : index
    %c0_0 = arith.constant 0 : index
    %0 = vector.load %arg2[%c0, %c0_0] : memref<24x4xf32, #tpu.memory_space<vmem>>, vector<24x4xf32>
    %c0_1 = arith.constant 0 : index
    %c0_2 = arith.constant 0 : index
    %1 = vector.load %arg3[%c0_1, %c0_2] : memref<8x1xf32, #tpu.memory_space<vmem>>, vector<8x1xf32>
    %c0_3 = arith.constant 0 : index
    %c0_4 = arith.constant 0 : index
    %c0_5 = arith.constant 0 : index
    %2 = vector.load %arg1[%c0_3, %c0_4, %c0_5] : memref<1x4x256xf32, #tpu.memory_space<vmem>>, vector<1x4x256xf32>
    %3 = vector.shape_cast %2 : vector<1x4x256xf32> to vector<4x256xf32>
    %cst = arith.constant dense<0.000000e+00> : vector<24x256xf32>
    %4 = tpu.matmul %0, %3, %cst {dimension_numbers = #tpu.dot_dimension_numbers<[1], [0], [0], [1], [0, 0, 1, 1], [], []>} : vector<24x4xf32>, vector<4x256xf32>, vector<24x256xf32> -> vector<24x256xf32>
    %5 = vector.extract_strided_slice %4 {offsets = [0, 0], sizes = [8, 254], strides = [1, 1]} : vector<24x256xf32> to vector<8x254xf32>
    %6 = vector.extract_strided_slice %4 {offsets = [8, 1], sizes = [8, 254], strides = [1, 1]} : vector<24x256xf32> to vector<8x254xf32>
    %7 = arith.addf %5, %6 : vector<8x254xf32>
    %8 = vector.extract_strided_slice %4 {offsets = [16, 2], sizes = [8, 254], strides = [1, 1]} : vector<24x256xf32> to vector<8x254xf32>
    %9 = arith.addf %7, %8 : vector<8x254xf32>
    %10 = vector.broadcast %1 : vector<8x1xf32> to vector<8x254xf32>
    %11 = arith.addf %9, %10 : vector<8x254xf32>
    %cst_6 = arith.constant 0.000000e+00 : f32
    %12 = vector.broadcast %cst_6 : f32 to vector<8x254xf32>
    %13 = arith.maximumf %11, %12 : vector<8x254xf32>
    %cst_7 = arith.constant 0.000000e+00 : f32
    %14 = vector.broadcast %cst_7 : f32 to vector<8x2xf32>
    %15 = tpu.concatenate %13, %14 in 1 : vector<8x254xf32>, vector<8x2xf32> -> vector<8x256xf32>
    %16 = vector.shape_cast %15 : vector<8x256xf32> to vector<8x16x16xf32>
    %17 = vector.extract_strided_slice %16 {offsets = [0, 0, 0], sizes = [8, 16, 14], strides = [1, 1, 1]} : vector<8x16x16xf32> to vector<8x16x14xf32>
    %cst_8 = arith.constant dense<0xFF800000> : vector<8x14xf32>
    %18 = vector.multi_reduction <maximumf>, %17, %cst_8 [1] : vector<8x16x14xf32> to vector<8x14xf32>
    %19 = vector.shape_cast %18 : vector<8x14xf32> to vector<8x1x14xf32>
    %20 = tpu.iota {dimensions = array<i32: 1>} : vector<8x16x14xi32>
    %21 = vector.broadcast %19 : vector<8x1x14xf32> to vector<8x16x14xf32>
    %22 = arith.cmpf oeq, %17, %21 : vector<8x16x14xf32>
    %c16_i32 = arith.constant 16 : i32
    %23 = vector.broadcast %c16_i32 : i32 to vector<8x16x14xi32>
    %24 = arith.select %22, %20, %23 : vector<8x16x14xi1>, vector<8x16x14xi32>
    %cst_9 = arith.constant dense<2147483647> : vector<8x14xi32>
    %25 = vector.multi_reduction <minsi>, %24, %cst_9 [1] : vector<8x16x14xi32> to vector<8x14xi32>
    %c0_10 = arith.constant 0 : index
    %c0_11 = arith.constant 0 : index
    %c0_12 = arith.constant 0 : index
    %26 = vector.load %arg4[%c0_10, %c0_11, %c0_12] : memref<1x8x14xi32, #tpu.memory_space<vmem>>, vector<1x8x14xi32>
    %27 = vector.shape_cast %26 : vector<1x8x14xi32> to vector<8x14xi32>
    %28 = vector.shape_cast %25 : vector<8x14xi32> to vector<1x8x14xi32>
    tpu.vector_store %arg4[%c0_10, %c0_11, %c0_12], %28 {strides = array<i32>} : memref<1x8x14xi32, #tpu.memory_space<vmem>>, vector<1x8x14xi32>,
    return
  }
  func.func @transform_0(%arg0: i32) -> (i32, i32, i32) {
    %c0_i32 = arith.constant 0 : i32
    %c0_i32_0 = arith.constant 0 : i32
    %c0_i32_1 = arith.constant 0 : i32
    return %arg0, %c0_i32, %c0_i32_0 : i32, i32, i32
  }
  func.func @transform_1(%arg0: i32) -> (i32, i32) {
    %c0_i32 = arith.constant 0 : i32
    %c0_i32_0 = arith.constant 0 : i32
    %c0_i32_1 = arith.constant 0 : i32
    return %c0_i32, %c0_i32_0 : i32, i32
  }
  func.func @transform_2(%arg0: i32) -> (i32, i32) {
    %c0_i32 = arith.constant 0 : i32
    %c0_i32_0 = arith.constant 0 : i32
    %c0_i32_1 = arith.constant 0 : i32
    return %c0_i32, %c0_i32_0 : i32, i32
  }
  func.func @transform_3(%arg0: i32) -> (i32, i32, i32) {
    %c0_i32 = arith.constant 0 : i32
    %c0_i32_0 = arith.constant 0 : i32
    %c0_i32_1 = arith.constant 0 : i32
    return %arg0, %c0_i32, %c0_i32_0 : i32, i32, i32
  }
}

</mosaic_0001>

<llo_original>
// kernel: tpu_custom_call.1
$region0: #{tpu_custom_call.1}
  #allocation0 [shape = 'u32[]', space=smem, size = 0x4, offset = 0x4, fixed_abs, tag = 'smem constant byte address 0x4 - core index']
  #allocation1 [shape = 'u32[144,128]{1,0:T(1,128)}', space=vmem, size = 0x12000, scoped, tag = 'internal scratch']
  %s0 = inlined_call_operand.vmem [shape: f32[2,4,256], index: 0, kind: input, shape index: {}]
  %s1 = inlined_call_operand.vmem [shape: f32[24,4], index: 1, kind: input, shape index: {}]
  %s2 = inlined_call_operand.vmem [shape: f32[8,1], index: 2, kind: input, shape index: {}]
  %s3 = inlined_call_operand.hbm [shape: s32[2,8,14], index: 3, kind: output, shape index: {}]
  %s4 = sld [smem:[#allocation0]]
  $region45: #{tpu_custom_call.1} parent=0
    _
  %s6 = ssub.s32 1, %s4
  %s7 = scalar_select 0, %s6, %s4
  $region1: #{tpu_custom_call.1} parent=0
    #allocation2 [shape = 'u8[8192]{0}', space=vmem, size = 0x2000, scoped, tag = 'output window, operand 0']
    #allocation3 [shape = 's32[2]{0}', space=sflag, size = 0x8, scoped, tag = 'scoped memory for tpu_custom_call.1']
    %8 = vsyncpa [#allocation3], 0
    %s9 = scalar_lea.sflag [#allocation3], 1
    %10 = vsyncpa %s9, 0
    loop: start=0, step=1, limit=4
    $region2: #{tpu_custom_call.1} parent=1 // loop_pre_header
      _
    $region3: #{tpu_custom_call.1} parent=1 // loop_header
      %s12 = sphi 0, %s16
      %p13 = scmp.ge.s32.totalorder %s12, 4
      %s22 = sphi 0, %s24
      %s25 = sphi 0, %s22
      %s26 = sphi 0, %s25
      %s42 = sphi 0, %s26
      %s46 = sphi 0, %s46
      %s48 = sphi 0, %s46
      %s49 = sphi 0, %s48
      %s63 = sphi 0, %s49
      %s67 = sphi 0, %s67
      %s69 = sphi 0, %s67
      %s70 = sphi 0, %s69
      %s84 = sphi 0, %s70
      %s90 = sphi 0, %s92
      %s93 = sphi 0, %s90
      %s94 = sphi 0, %s93
      %s110 = sphi 0, %s94
    $region4: #{tpu_custom_call.1} parent=1 // loop_header_branch
      %15 = sbr.rel (%p13) target = $region8
    $region5: #{tpu_custom_call.1} parent=1 // loop_body
      %s17 = ssub.s32 %s12, 1
      %s18 = ssub.s32 %s12, 2
      %s19 = sadd.s32 %s12, 1
      %s20 = ssub.s32 %s12, %s19
      %p21 = scmp.eq.s32.totalorder %s20, 0
      %s23 = sadd.s32 %s22, 1
      %s24 = scalar_select %p21, %s22, %s23
      %p27 = pneg %p21
      %p28 = scmp.eq.s32.totalorder %s12, 1
      %p29 = por %p27, %p28
      %p30 = scmp.ne.s32.totalorder %s22, %s25
      %p31 = scmp.eq.s32.totalorder %s12, 0
      %p32 = por %p30, %p31
      %p33 = scmp.ne.s32.totalorder %s22, %s25
      %p34 = scmp.eq.s32.totalorder %s17, 1
      %p35 = por %p33, %p34
      %p36 = scmp.ne.s32.totalorder %s25, %s26
      %p37 = scmp.eq.s32.totalorder %s17, 0
      %p38 = por %p36, %p37
      %p39 = scmp.ne.s32.totalorder %s25, %s26
      %p40 = scmp.eq.s32.totalorder %s18, 1
      %p41 = por %p39, %p40
      %p43 = scmp.ne.s32.totalorder %s26, %s42
      %p44 = scmp.eq.s32.totalorder %s18, 0
      %p45 = por %p43, %p44
      %s47 = sadd.s32 %s46, 1
      %p50 = scmp.eq.s32.totalorder %s12, 1
      %p51 = scmp.ne.s32.totalorder %s46, %s48
      %p52 = scmp.eq.s32.totalorder %s12, 0
      %p53 = por %p51, %p52
      %p54 = scmp.ne.s32.totalorder %s46, %s48
      %p55 = scmp.eq.s32.totalorder %s17, 1
      %p56 = por %p54, %p55
      %p57 = scmp.ne.s32.totalorder %s48, %s49
      %p58 = scmp.eq.s32.totalorder %s17, 0
      %p59 = por %p57, %p58
      %p60 = scmp.ne.s32.totalorder %s48, %s49
      %p61 = scmp.eq.s32.totalorder %s18, 1
      %p62 = por %p60, %p61
      %p64 = scmp.ne.s32.totalorder %s49, %s63
      %p65 = scmp.eq.s32.totalorder %s18, 0
      %p66 = por %p64, %p65
      %s68 = sadd.s32 %s67, 1
      %p71 = scmp.eq.s32.totalorder %s12, 1
      %p72 = scmp.ne.s32.totalorder %s67, %s69
      %p73 = scmp.eq.s32.totalorder %s12, 0
      %p74 = por %p72, %p73
      %p75 = scmp.ne.s32.totalorder %s67, %s69
      %p76 = scmp.eq.s32.totalorder %s17, 1
      %p77 = por %p75, %p76
      %p78 = scmp.ne.s32.totalorder %s69, %s70
      %p79 = scmp.eq.s32.totalorder %s17, 0
      %p80 = por %p78, %p79
      %p81 = scmp.ne.s32.totalorder %s69, %s70
      %p82 = scmp.eq.s32.totalorder %s18, 1
      %p83 = por %p81, %p82
      %p85 = scmp.ne.s32.totalorder %s70, %s84
      %p86 = scmp.eq.s32.totalorder %s18, 0
      %p87 = por %p85, %p86
      %s88 = ssub.s32 %s12, %s19
      %p89 = scmp.eq.s32.totalorder %s88, 0
      %s91 = sadd.s32 %s90, 1
      %s92 = scalar_select %p89, %s90, %s91
      %p95 = pneg %p89
      %p96 = scmp.eq.s32.totalorder %s12, 1
      %p97 = por %p95, %p96
      %p98 = scmp.ne.s32.totalorder %s90, %s93
      %p99 = scmp.eq.s32.totalorder %s12, 0
      %p100 = por %p98, %p99
      %p101 = scmp.ne.s32.totalorder %s90, %s93
      %p102 = scmp.eq.s32.totalorder %s17, 1
      %p103 = por %p101, %p102
      %p104 = scmp.ne.s32.totalorder %s93, %s94
      %p105 = scmp.eq.s32.totalorder %s17, 0
      %p106 = por %p104, %p105
      %p107 = scmp.ne.s32.totalorder %s93, %s94
      %p108 = scmp.eq.s32.totalorder %s18, 1
      %p109 = por %p107, %p108
      %p111 = scmp.ne.s32.totalorder %s94, %s110
      %p112 = scmp.eq.s32.totalorder %s18, 0
      %p113 = por %p111, %p112
      %p114 = scmp.le.s32.totalorder 1, %s12
      %p115 = scmp.lt.s32.totalorder %s12, 3
      %p116 = pnand %p114, %p115
      %p117 = pneg %p116
      // Predicated region
      $region9: #{tpu_custom_call.1} parent=5 // pred_check
        _
      $region10: #{tpu_custom_call.1} parent=5 // pred_check_branch
        %119 = sbr.rel (%p116) target = $region12
      $region11: #{tpu_custom_call.1} parent=5 // pred_region
        %s120 = ssub.s32 %s12, 1
        // Predicated region
        $region13: #{tpu_custom_call.1} parent=11 // pred_check
          %p121 = pneg %p59
        $region14: #{tpu_custom_call.1} parent=11 // pred_check_branch
          %123 = sbr.rel (%p121) target = $region16
        $region15: #{tpu_custom_call.1} parent=11 // pred_region
          _
        $region16: #{tpu_custom_call.1} parent=11 // pred_fallthru
          _
        // Predicated region
        $region17: #{tpu_custom_call.1} parent=11 // pred_check
          %p124 = pneg %p80
        $region18: #{tpu_custom_call.1} parent=11 // pred_check_branch
          %126 = sbr.rel (%p124) target = $region20
        $region19: #{tpu_custom_call.1} parent=11 // pred_region
          _
        $region20: #{tpu_custom_call.1} parent=11 // pred_fallthru
          _
      $region12: #{tpu_custom_call.1} parent=5 // pred_fallthru
        _
      %p127 = scmp.lt.s32.totalorder %s12, 2
      // Predicated region
      $region21: #{tpu_custom_call.1} parent=5 // pred_check
        %p128 = pneg %p127
      $region22: #{tpu_custom_call.1} parent=5 // pred_check_branch
        %130 = sbr.rel (%p128) target = $region24
      $region23: #{tpu_custom_call.1} parent=5 // pred_region
        // Predicated region
        $region25: #{tpu_custom_call.1} parent=23 // pred_check
          %p131 = pneg %p32
        $region26: #{tpu_custom_call.1} parent=23 // pred_check_branch
          %133 = sbr.rel (%p131) target = $region28
        $region27: #{tpu_custom_call.1} parent=23 // pred_region
          %p134 = scmp.lt.s32.totalorder %s12, 1
          %s135 = scalar_select %p134, %s12, 1
          %s136 = smul.addr %s135, 2
          %s137 = smul.addr %s136, 4
          %s138 = scalar_lea.vmem %s0, %s137
        $region28: #{tpu_custom_call.1} parent=23 // pred_fallthru
          _
      $region24: #{tpu_custom_call.1} parent=5 // pred_fallthru
        _
      %p139 = scmp.le.s32.totalorder 1, %s12
      %p140 = scmp.lt.s32.totalorder %s12, 3
      %p141 = pnand %p139, %p140
      %p142 = pneg %p141
      // Predicated region
      $region29: #{tpu_custom_call.1} parent=5 // pred_check
        _
      $region30: #{tpu_custom_call.1} parent=5 // pred_check_branch
        %144 = sbr.rel (%p141) target = $region32
      $region31: #{tpu_custom_call.1} parent=5 // pred_region
        %s145 = ssub.s32 %s12, 1
        %p146 = scmp.lt.s32.totalorder %s17, 1
        %s147 = scalar_select %p146, %s17, 1
        %s148 = smul.addr %s147, 2
        %s149 = smul.addr %s148, 4
        %s150 = scalar_lea.vmem %s0, %s149
        %p151 = pneg %p38
        %p152 = pneg %p35
        %p153 = pneg %p59
        %p154 = pneg %p56
        %p155 = pneg %p80
        %p156 = pneg %p77
        %p157 = pneg %p106
        %p158 = pneg %p103
        %s159 = sand.u32 %s93, 1
        %s160 = scalar_lea.sflag [#allocation3], %s159
        %s161 = sand.u32 %s93, 1
        %s162 = smul.addr %s161, 8
        %s163 = scalar_lea.vmem [#allocation2], %s162
        %p164 = scmp.lt.s32.totalorder %s17, 1
        %s165 = scalar_select %p164, %s17, 1
        %s166 = smul.addr %s165, 2
        %s167 = smul.addr %s166, 4
        %s168 = scalar_lea.vmem %s0, %s167
        %v169 = vld [vmem:[%s1] sm:$0xff]
        %v170 = vld [vmem:[%s1 + $0x8] sm:$0xff]
        %v171 = vld [vmem:[%s1 + $0x10] sm:$0xff]
        %v172 = vld [vmem:[%s2] sm:$0xff]
        %v173 = vld [vmem:[%s168] sm:$0xff]
        %v175 = vcombine.high %v173, %v173
        %vm176 = vcmask 31744
        %v178 = vsel %vm176, %v169, 0
        %v181 = vsel %vm176, %v170, 0
        %v184 = vsel %vm176, %v171, 0
        %vm186 = vcmask 1043456
        %v187 = vsel %vm186, %v173, 0
        %v189 = vsel %vm186, %v175, 0
        %191 = vmatprep.subr.mxu0 %v189
        %192 = vmatpush1.msra.mxu0 %v187
        %193 = vmatprep.subr.mxu0 0.0
        %194 = vmatpush1.msra.mxu0 0.0
        %195 = vmatprep.subr.mxu0 0.0
        %196 = vmatpush1.msra.mxu0 0.0
        %197 = vmatprep.subr.mxu0 0.0
        %198 = vmatpush1.msra.mxu0 0.0
        %199 = vmatprep.subr.mxu0 0.0
        %200 = vmatpush1.msra.mxu0 0.0
        %201 = vmatprep.subr.mxu0 0.0
        %202 = vmatpush1.msra.mxu0 0.0
        %203 = vmatprep.subr.mxu0 0.0
        %204 = vmatpush1.msra.mxu0 0.0
        %205 = vmatprep.subr.mxu0 0.0
        %206 = vmatpush1.msra.mxu0 0.0
        %207 = vmatprep.subr.mxu0 0.0
        %208 = vmatpush1.msra.mxu0 0.0
        %209 = vmatprep.subr.mxu0 0.0
        %210 = vmatpush1.msra.mxu0 0.0
        %211 = vmatprep.subr.mxu0 0.0
        %212 = vmatpush1.msra.mxu0 0.0
        %213 = vmatprep.subr.mxu0 0.0
        %214 = vmatpush1.msra.mxu0 0.0
        %215 = vmatprep.subr.mxu0 0.0
        %216 = vmatpush1.msra.mxu0 0.0
        %217 = vmatprep.subr.mxu0 0.0
        %218 = vmatpush1.msra.mxu0 0.0
        %219 = vmatprep.subr.mxu0 0.0
        %220 = vmatpush1.msra.mxu0 0.0
        %221 = vmatprep.subr.mxu0 0.0
        %222 = vmatpush1.msra.mxu0 0.0
        %223 = vmatprep.subr.mxu0 0.0
        %224 = vmatpush1.msra.mxu0 0.0
        %225 = vmatprep.subr.mxu0 0.0
        %226 = vmatpush1.msra.mxu0 0.0
        %227 = vmatprep.subr.mxu0 0.0
        %228 = vmatpush1.msra.mxu0 0.0
        %229 = vmatprep.subr.mxu0 0.0
        %230 = vmatpush1.msra.mxu0 0.0
        %231 = vmatprep.subr.mxu0 0.0
        %232 = vmatpush1.msra.mxu0 0.0
        %233 = vmatprep.subr.mxu0 0.0
        %234 = vmatpush1.msra.mxu0 0.0
        %235 = vmatprep.subr.mxu0 0.0
        %236 = vmatpush1.msra.mxu0 0.0
        %237 = vmatprep.subr.mxu0 0.0
        %238 = vmatpush1.msra.mxu0 0.0
        %239 = vmatprep.subr.mxu0 0.0
        %240 = vmatpush1.msra.mxu0 0.0
        %241 = vmatprep.subr.mxu0 0.0
        %242 = vmatpush1.msra.mxu0 0.0
        %243 = vmatprep.subr.mxu0 0.0
        %244 = vmatpush1.msra.mxu0 0.0
        %245 = vmatprep.subr.mxu0 0.0
        %246 = vmatpush1.msra.mxu0 0.0
        %247 = vmatprep.subr.mxu0 0.0
        %248 = vmatpush1.msra.mxu0 0.0
        %249 = vmatprep.subr.mxu0 0.0
        %250 = vmatpush1.msra.mxu0 0.0
        %251 = vmatprep.subr.mxu0 0.0
        %252 = vmatpush1.msra.mxu0 0.0
        %253 = vmatprep.subr.mxu0 0.0
        %254 = vmatpush1.msra.mxu0 0.0
        %255 = vmatprep.mubr.f32.mxu0 0.0
        %256 = vmatmul.mubr.f32.gmra.mrb[0].mxu0 %v178
        %v257 = vpop.f32.mrb[0].mxu0
        %v258 = vadd.f32 0.0, %v257
        %v259 = vpop.f32.mrb[0].mxu0
        %v260 = vadd.f32 0.0, %v259
        %261 = vmatprep.mubr.f32.mxu0 0.0
        %262 = vmatmul.mubr.f32.gmra.mrb[0].mxu0 %v181
        %v263 = vpop.f32.mrb[0].mxu0
        %v264 = vadd.f32 0.0, %v263
        %v265 = vpop.f32.mrb[0].mxu0
        %v266 = vadd.f32 0.0, %v265
        %267 = vmatprep.mubr.f32.mxu0 0.0
        %268 = vmatmul.mubr.f32.gmra.mrb[0].mxu0 %v184
        %v269 = vpop.f32.mrb[0].mxu0
        %v270 = vadd.f32 0.0, %v269
        %v271 = vpop.f32.mrb[0].mxu0
        %v272 = vadd.f32 0.0, %v271
        %273 = vdwg.mxu0
        %276 = vrot.lane.b32.xlu0 %v264, 127
        %v277 = vpop.permute.xlu0 %276
        %278 = vrot.lane.b32.xlu0 %v266, 127
        %v279 = vpop.permute.xlu0 %278
        %vm280 = vcmask 1039360
        %v281 = vsel %vm280, %v277, %v279
        %v284 = vadd.f32 %v258, %v281
        %v285 = vadd.f32 %v260, %v279
        %288 = vrot.lane.b32.xlu0 %v270, 126
        %v289 = vpop.permute.xlu0 %288
        %290 = vrot.lane.b32.xlu0 %v272, 126
        %v291 = vpop.permute.xlu0 %290
        %vm292 = vcmask 1031168
        %v293 = vsel %vm292, %v289, %v291
        %v296 = vadd.f32 %v284, %v293
        %v297 = vadd.f32 %v285, %v291
        %299 = vset.pattern.permute.xlu0 0
        %300 = vperm.xlu0 %299, %v172
        %v301 = vpop.permute.xlu0 %300
        %v303 = vadd.f32 %v296, %v301
        %v304 = vadd.f32 %v297, %v301
        %v305 = vmax.f32 %v303, 0.0
        %v306 = vmax.f32 %v304, 0.0
        %v307 = vsel %vm292, %v306, 0.0
        %309 = vrot.lane.b32.xlu0 %v305, 112
        %v310 = vpop.permute.xlu0 %309
        %312 = vrot.lane.b32.xlu0 %v305, 96
        %v313 = vpop.permute.xlu0 %312
        %315 = vrot.lane.b32.xlu0 %v305, 80
        %v316 = vpop.permute.xlu0 %315
        %318 = vrot.lane.b32.xlu0 %v305, 64
        %v319 = vpop.permute.xlu0 %318
        %321 = vrot.lane.b32.xlu0 %v305, 48
        %v322 = vpop.permute.xlu0 %321
        %324 = vrot.lane.b32.xlu0 %v305, 32
        %v325 = vpop.permute.xlu0 %324
        %327 = vrot.lane.b32.xlu0 %v305, 16
        %v328 = vpop.permute.xlu0 %327
        %331 = vrot.lane.b32.xlu0 %v307, 112
        %v332 = vpop.permute.xlu0 %331
        %334 = vrot.lane.b32.xlu0 %v307, 96
        %v335 = vpop.permute.xlu0 %334
        %337 = vrot.lane.b32.xlu0 %v307, 80
        %v338 = vpop.permute.xlu0 %337
        %340 = vrot.lane.b32.xlu0 %v307, 64
        %v341 = vpop.permute.xlu0 %340
        %343 = vrot.lane.b32.xlu0 %v307, 48
        %v344 = vpop.permute.xlu0 %343
        %346 = vrot.lane.b32.xlu0 %v307, 32
        %v347 = vpop.permute.xlu0 %346
        %349 = vrot.lane.b32.xlu0 %v307, 16
        %v350 = vpop.permute.xlu0 %349
        %v352 = vcombine.low %v305, %v313
        %v353 = vcombine.high %v305, %v313
        %v355 = vunpack.c.l.s4 1983009808
        %v356 = vunpack.c.0.s8 %v355
        %v357 = vlaneseq
        %v358 = vshrl.u32 %v357, 7
        %v359 = vsub.s32 %v356, %v358
        %v360 = vrot.slane %v352, %v359
        %v362 = vunpack.c.l.s4 1983009808
        %v363 = vunpack.c.0.s8 %v362
        %v364 = vlaneseq
        %v365 = vshrl.u32 %v364, 7
        %v366 = vsub.s32 %v363, %v365
        %v367 = vrot.slane %v353, %v366
        %v368 = vcombine.low %v310, %v316
        %v369 = vcombine.high %v310, %v316
        %v371 = vunpack.c.l.s4 1983009808
        %v372 = vunpack.c.0.s8 %v371
        %v373 = vlaneseq
        %v374 = vshrl.u32 %v373, 7
        %v375 = vsub.s32 %v372, %v374
        %v376 = vrot.slane %v368, %v375
        %v378 = vunpack.c.l.s4 1983009808
        %v379 = vunpack.c.0.s8 %v378
        %v380 = vlaneseq
        %v381 = vshrl.u32 %v380, 7
        %v382 = vsub.s32 %v379, %v381
        %v383 = vrot.slane %v369, %v382
        %v384 = vcombine.low %v319, %v325
        %v385 = vcombine.high %v319, %v325
        %v387 = vunpack.c.l.s4 1983009808
        %v388 = vunpack.c.0.s8 %v387
        %v389 = vlaneseq
        %v390 = vshrl.u32 %v389, 7
        %v391 = vsub.s32 %v388, %v390
        %v392 = vrot.slane %v384, %v391
        %v394 = vunpack.c.l.s4 1983009808
        %v395 = vunpack.c.0.s8 %v394
        %v396 = vlaneseq
        %v397 = vshrl.u32 %v396, 7
        %v398 = vsub.s32 %v395, %v397
        %v399 = vrot.slane %v385, %v398
        %v400 = vcombine.low %v322, %v328
        %v401 = vcombine.high %v322, %v328
        %v403 = vunpack.c.l.s4 1983009808
        %v404 = vunpack.c.0.s8 %v403
        %v405 = vlaneseq
        %v406 = vshrl.u32 %v405, 7
        %v407 = vsub.s32 %v404, %v406
        %v408 = vrot.slane %v400, %v407
        %v410 = vunpack.c.l.s4 1983009808
        %v411 = vunpack.c.0.s8 %v410
        %v412 = vlaneseq
        %v413 = vshrl.u32 %v412, 7
        %v414 = vsub.s32 %v411, %v413
        %v415 = vrot.slane %v401, %v414
        %v416 = vcombine.low %v360, %v376
        %v417 = vcombine.high %v360, %v376
        %v419 = vunpack.c.l.s4 1934713408
        %v420 = vunpack.c.0.s8 %v419
        %v421 = vlaneseq
        %v422 = vshrl.u32 %v421, 7
        %v423 = vsub.s32 %v420, %v422
        %v424 = vrot.slane %v416, %v423
        %v426 = vunpack.c.l.s4 1934713408
        %v427 = vunpack.c.0.s8 %v426
        %v428 = vlaneseq
        %v429 = vshrl.u32 %v428, 7
        %v430 = vsub.s32 %v427, %v429
        %v431 = vrot.slane %v417, %v430
        %v432 = vcombine.low %v367, %v383
        %v433 = vcombine.high %v367, %v383
        %v435 = vunpack.c.l.s4 1934713408
        %v436 = vunpack.c.0.s8 %v435
        %v437 = vlaneseq
        %v438 = vshrl.u32 %v437, 7
        %v439 = vsub.s32 %v436, %v438
        %v440 = vrot.slane %v432, %v439
        %v442 = vunpack.c.l.s4 1934713408
        %v443 = vunpack.c.0.s8 %v442
        %v444 = vlaneseq
        %v445 = vshrl.u32 %v444, 7
        %v446 = vsub.s32 %v443, %v445
        %v447 = vrot.slane %v433, %v446
        %v448 = vcombine.low %v392, %v408
        %v449 = vcombine.high %v392, %v408
        %v451 = vunpack.c.l.s4 1934713408
        %v452 = vunpack.c.0.s8 %v451
        %v453 = vlaneseq
        %v454 = vshrl.u32 %v453, 7
        %v455 = vsub.s32 %v452, %v454
        %v456 = vrot.slane %v448, %v455
        %v458 = vunpack.c.l.s4 1934713408
        %v459 = vunpack.c.0.s8 %v458
        %v460 = vlaneseq
        %v461 = vshrl.u32 %v460, 7
        %v462 = vsub.s32 %v459, %v461
        %v463 = vrot.slane %v449, %v462
        %v464 = vcombine.low %v399, %v415
        %v465 = vcombine.high %v399, %v415
        %v467 = vunpack.c.l.s4 1934713408
        %v468 = vunpack.c.0.s8 %v467
        %v469 = vlaneseq
        %v470 = vshrl.u32 %v469, 7
        %v471 = vsub.s32 %v468, %v470
        %v472 = vrot.slane %v464, %v471
        %v474 = vunpack.c.l.s4 1934713408
        %v475 = vunpack.c.0.s8 %v474
        %v476 = vlaneseq
        %v477 = vshrl.u32 %v476, 7
        %v478 = vsub.s32 %v475, %v477
        %v479 = vrot.slane %v465, %v478
        %v480 = vcombine.low %v424, %v456
        %v481 = vcombine.high %v424, %v456
        %v482 = vcombine.low %v431, %v463
        %v483 = vcombine.high %v431, %v463
        %v484 = vcombine.low %v440, %v472
        %v485 = vcombine.high %v440, %v472
        %v486 = vcombine.low %v447, %v479
        %v487 = vcombine.high %v447, %v479
        %v488 = vcombine.low %v307, %v335
        %v489 = vcombine.high %v307, %v335
        %v491 = vunpack.c.l.s4 1983009808
        %v492 = vunpack.c.0.s8 %v491
        %v493 = vlaneseq
        %v494 = vshrl.u32 %v493, 7
        %v495 = vsub.s32 %v492, %v494
        %v496 = vrot.slane %v488, %v495
        %v498 = vunpack.c.l.s4 1983009808
        %v499 = vunpack.c.0.s8 %v498
        %v500 = vlaneseq
        %v501 = vshrl.u32 %v500, 7
        %v502 = vsub.s32 %v499, %v501
        %v503 = vrot.slane %v489, %v502
        %v504 = vcombine.low %v332, %v338
        %v505 = vcombine.high %v332, %v338
        %v507 = vunpack.c.l.s4 1983009808
        %v508 = vunpack.c.0.s8 %v507
        %v509 = vlaneseq
        %v510 = vshrl.u32 %v509, 7
        %v511 = vsub.s32 %v508, %v510
        %v512 = vrot.slane %v504, %v511
        %v514 = vunpack.c.l.s4 1983009808
        %v515 = vunpack.c.0.s8 %v514
        %v516 = vlaneseq
        %v517 = vshrl.u32 %v516, 7
        %v518 = vsub.s32 %v515, %v517
        %v519 = vrot.slane %v505, %v518
        %v520 = vcombine.low %v341, %v347
        %v521 = vcombine.high %v341, %v347
        %v523 = vunpack.c.l.s4 1983009808
        %v524 = vunpack.c.0.s8 %v523
        %v525 = vlaneseq
        %v526 = vshrl.u32 %v525, 7
        %v527 = vsub.s32 %v524, %v526
        %v528 = vrot.slane %v520, %v527
        %v530 = vunpack.c.l.s4 1983009808
        %v531 = vunpack.c.0.s8 %v530
        %v532 = vlaneseq
        %v533 = vshrl.u32 %v532, 7
        %v534 = vsub.s32 %v531, %v533
        %v535 = vrot.slane %v521, %v534
        %v536 = vcombine.low %v344, %v350
        %v537 = vcombine.high %v344, %v350
        %v539 = vunpack.c.l.s4 1983009808
        %v540 = vunpack.c.0.s8 %v539
        %v541 = vlaneseq
        %v542 = vshrl.u32 %v541, 7
        %v543 = vsub.s32 %v540, %v542
        %v544 = vrot.slane %v536, %v543
        %v546 = vunpack.c.l.s4 1983009808
        %v547 = vunpack.c.0.s8 %v546
        %v548 = vlaneseq
        %v549 = vshrl.u32 %v548, 7
        %v550 = vsub.s32 %v547, %v549
        %v551 = vrot.slane %v537, %v550
        %v552 = vcombine.low %v496, %v512
        %v553 = vcombine.high %v496, %v512
        %v555 = vunpack.c.l.s4 1934713408
        %v556 = vunpack.c.0.s8 %v555
        %v557 = vlaneseq
        %v558 = vshrl.u32 %v557, 7
        %v559 = vsub.s32 %v556, %v558
        %v560 = vrot.slane %v552, %v559
        %v562 = vunpack.c.l.s4 1934713408
        %v563 = vunpack.c.0.s8 %v562
        %v564 = vlaneseq
        %v565 = vshrl.u32 %v564, 7
        %v566 = vsub.s32 %v563, %v565
        %v567 = vrot.slane %v553, %v566
        %v568 = vcombine.low %v503, %v519
        %v569 = vcombine.high %v503, %v519
        %v571 = vunpack.c.l.s4 1934713408
        %v572 = vunpack.c.0.s8 %v571
        %v573 = vlaneseq
        %v574 = vshrl.u32 %v573, 7
        %v575 = vsub.s32 %v572, %v574
        %v576 = vrot.slane %v568, %v575
        %v578 = vunpack.c.l.s4 1934713408
        %v579 = vunpack.c.0.s8 %v578
        %v580 = vlaneseq
        %v581 = vshrl.u32 %v580, 7
        %v582 = vsub.s32 %v579, %v581
        %v583 = vrot.slane %v569, %v582
        %v584 = vcombine.low %v528, %v544
        %v585 = vcombine.high %v528, %v544
        %v587 = vunpack.c.l.s4 1934713408
        %v588 = vunpack.c.0.s8 %v587
        %v589 = vlaneseq
        %v590 = vshrl.u32 %v589, 7
        %v591 = vsub.s32 %v588, %v590
        %v592 = vrot.slane %v584, %v591
        %v594 = vunpack.c.l.s4 1934713408
        %v595 = vunpack.c.0.s8 %v594
        %v596 = vlaneseq
        %v597 = vshrl.u32 %v596, 7
        %v598 = vsub.s32 %v595, %v597
        %v599 = vrot.slane %v585, %v598
        %v600 = vcombine.low %v535, %v551
        %v601 = vcombine.high %v535, %v551
        %v603 = vunpack.c.l.s4 1934713408
        %v604 = vunpack.c.0.s8 %v603
        %v605 = vlaneseq
        %v606 = vshrl.u32 %v605, 7
        %v607 = vsub.s32 %v604, %v606
        %v608 = vrot.slane %v600, %v607
        %v610 = vunpack.c.l.s4 1934713408
        %v611 = vunpack.c.0.s8 %v610
        %v612 = vlaneseq
        %v613 = vshrl.u32 %v612, 7
        %v614 = vsub.s32 %v611, %v613
        %v615 = vrot.slane %v601, %v614
        %v616 = vcombine.low %v560, %v592
        %v617 = vcombine.high %v560, %v592
        %v618 = vcombine.low %v567, %v599
        %v619 = vcombine.high %v567, %v599
        %v620 = vcombine.low %v576, %v608
        %v621 = vcombine.high %v576, %v608
        %v622 = vcombine.low %v583, %v615
        %v623 = vcombine.high %v583, %v615
        %vm624 = vcmask 113664
        %v625 = vsel %vm624, %v480, -inf
        %v626 = vsel %vm624, %v616, -inf
        %v627 = vmax.f32 %v625, %v626
        %v628 = vrot.slane %v627, 4
        %v629 = vmax.f32 %v627, %v628
        %v630 = vrot.slane %v629, 2
        %v631 = vmax.f32 %v629, %v630
        %v632 = vrot.slane %v631, 1
        %v633 = vmax.f32 %v631, %v632
        %v634 = vsel %vm624, %v481, -inf
        %v635 = vsel %vm624, %v617, -inf
        %v636 = vmax.f32 %v634, %v635
        %v637 = vrot.slane %v636, 4
        %v638 = vmax.f32 %v636, %v637
        %v639 = vrot.slane %v638, 2
        %v640 = vmax.f32 %v638, %v639
        %v641 = vrot.slane %v640, 1
        %v642 = vmax.f32 %v640, %v641
        %v643 = vsel %vm624, %v482, -inf
        %v644 = vsel %vm624, %v618, -inf
        %v645 = vmax.f32 %v643, %v644
        %v646 = vrot.slane %v645, 4
        %v647 = vmax.f32 %v645, %v646
        %v648 = vrot.slane %v647, 2
        %v649 = vmax.f32 %v647, %v648
        %v650 = vrot.slane %v649, 1
        %v651 = vmax.f32 %v649, %v650
        %v652 = vsel %vm624, %v483, -inf
        %v653 = vsel %vm624, %v619, -inf
        %v654 = vmax.f32 %v652, %v653
        %v655 = vrot.slane %v654, 4
        %v656 = vmax.f32 %v654, %v655
        %v657 = vrot.slane %v656, 2
        %v658 = vmax.f32 %v656, %v657
        %v659 = vrot.slane %v658, 1
        %v660 = vmax.f32 %v658, %v659
        %v661 = vsel %vm624, %v484, -inf
        %v662 = vsel %vm624, %v620, -inf
        %v663 = vmax.f32 %v661, %v662
        %v664 = vrot.slane %v663, 4
        %v665 = vmax.f32 %v663, %v664
        %v666 = vrot.slane %v665, 2
        %v667 = vmax.f32 %v665, %v666
        %v668 = vrot.slane %v667, 1
        %v669 = vmax.f32 %v667, %v668
        %v670 = vsel %vm624, %v485, -inf
        %v671 = vsel %vm624, %v621, -inf
        %v672 = vmax.f32 %v670, %v671
        %v673 = vrot.slane %v672, 4
        %v674 = vmax.f32 %v672, %v673
        %v675 = vrot.slane %v674, 2
        %v676 = vmax.f32 %v674, %v675
        %v677 = vrot.slane %v676, 1
        %v678 = vmax.f32 %v676, %v677
        %v679 = vsel %vm624, %v486, -inf
        %v680 = vsel %vm624, %v622, -inf
        %v681 = vmax.f32 %v679, %v680
        %v682 = vrot.slane %v681, 4
        %v683 = vmax.f32 %v681, %v682
        %v684 = vrot.slane %v683, 2
        %v685 = vmax.f32 %v683, %v684
        %v686 = vrot.slane %v685, 1
        %v687 = vmax.f32 %v685, %v686
        %v688 = vsel %vm624, %v487, -inf
        %v689 = vsel %vm624, %v623, -inf
        %v690 = vmax.f32 %v688, %v689
        %v691 = vrot.slane %v690, 4
        %v692 = vmax.f32 %v690, %v691
        %v693 = vrot.slane %v692, 2
        %v694 = vmax.f32 %v692, %v693
        %v695 = vrot.slane %v694, 1
        %v696 = vmax.f32 %v694, %v695
        %v697 = vlaneseq
        %v698 = vshrl.u32 %v697, 7
        %v699 = vadd.s32 %v698, 8
        %vm700 = vcmp.eq.f32.partialorder %v480, %v633
        %vm701 = vcmp.eq.f32.partialorder %v616, %v633
        %vm702 = vcmp.eq.f32.partialorder %v481, %v642
        %vm703 = vcmp.eq.f32.partialorder %v617, %v642
        %vm704 = vcmp.eq.f32.partialorder %v482, %v651
        %vm705 = vcmp.eq.f32.partialorder %v618, %v651
        %vm706 = vcmp.eq.f32.partialorder %v483, %v660
        %vm707 = vcmp.eq.f32.partialorder %v619, %v660
        %vm708 = vcmp.eq.f32.partialorder %v484, %v669
        %vm709 = vcmp.eq.f32.partialorder %v620, %v669
        %vm710 = vcmp.eq.f32.partialorder %v485, %v678
        %vm711 = vcmp.eq.f32.partialorder %v621, %v678
        %vm712 = vcmp.eq.f32.partialorder %v486, %v687
        %vm713 = vcmp.eq.f32.partialorder %v622, %v687
        %vm714 = vcmp.eq.f32.partialorder %v487, %v696
        %vm715 = vcmp.eq.f32.partialorder %v623, %v696
        %v716 = vsel %vm700, %v698, 16
        %v717 = vsel %vm701, %v699, 16
        %v718 = vsel %vm702, %v698, 16
        %v719 = vsel %vm703, %v699, 16
        %v720 = vsel %vm704, %v698, 16
        %v721 = vsel %vm705, %v699, 16
        %v722 = vsel %vm706, %v698, 16
        %v723 = vsel %vm707, %v699, 16
        %v724 = vsel %vm708, %v698, 16
        %v725 = vsel %vm709, %v699, 16
        %v726 = vsel %vm710, %v698, 16
        %v727 = vsel %vm711, %v699, 16
        %v728 = vsel %vm712, %v698, 16
        %v729 = vsel %vm713, %v699, 16
        %v730 = vsel %vm714, %v698, 16
        %v731 = vsel %vm715, %v699, 16
        %v732 = vsel %vm624, %v716, 2147483647
        %v733 = vsel %vm624, %v717, 2147483647
        %vm734 = vcmp.lt.s32.totalorder %v732, %v733
        %v735 = vsel %vm734, %v732, %v733
        %v736 = vrot.slane %v735, 4
        %vm737 = vcmp.lt.s32.totalorder %v735, %v736
        %v738 = vsel %vm737, %v735, %v736
        %v739 = vrot.slane %v738, 2
        %vm740 = vcmp.lt.s32.totalorder %v738, %v739
        %v741 = vsel %vm740, %v738, %v739
        %v742 = vrot.slane %v741, 1
        %vm743 = vcmp.lt.s32.totalorder %v741, %v742
        %v744 = vsel %vm743, %v741, %v742
        %v745 = vsel %vm624, %v718, 2147483647
        %v746 = vsel %vm624, %v719, 2147483647
        %vm747 = vcmp.lt.s32.totalorder %v745, %v746
        %v748 = vsel %vm747, %v745, %v746
        %v749 = vrot.slane %v748, 4
        %vm750 = vcmp.lt.s32.totalorder %v748, %v749
        %v751 = vsel %vm750, %v748, %v749
        %v752 = vrot.slane %v751, 2
        %vm753 = vcmp.lt.s32.totalorder %v751, %v752
        %v754 = vsel %vm753, %v751, %v752
        %v755 = vrot.slane %v754, 1
        %vm756 = vcmp.lt.s32.totalorder %v754, %v755
        %v757 = vsel %vm756, %v754, %v755
        %v758 = vsel %vm624, %v720, 2147483647
        %v759 = vsel %vm624, %v721, 2147483647
        %vm760 = vcmp.lt.s32.totalorder %v758, %v759
        %v761 = vsel %vm760, %v758, %v759
        %v762 = vrot.slane %v761, 4
        %vm763 = vcmp.lt.s32.totalorder %v761, %v762
        %v764 = vsel %vm763, %v761, %v762
        %v765 = vrot.slane %v764, 2
        %vm766 = vcmp.lt.s32.totalorder %v764, %v765
        %v767 = vsel %vm766, %v764, %v765
        %v768 = vrot.slane %v767, 1
        %vm769 = vcmp.lt.s32.totalorder %v767, %v768
        %v770 = vsel %vm769, %v767, %v768
        %v771 = vsel %vm624, %v722, 2147483647
        %v772 = vsel %vm624, %v723, 2147483647
        %vm773 = vcmp.lt.s32.totalorder %v771, %v772
        %v774 = vsel %vm773, %v771, %v772
        %v775 = vrot.slane %v774, 4
        %vm776 = vcmp.lt.s32.totalorder %v774, %v775
        %v777 = vsel %vm776, %v774, %v775
        %v778 = vrot.slane %v777, 2
        %vm779 = vcmp.lt.s32.totalorder %v777, %v778
        %v780 = vsel %vm779, %v777, %v778
        %v781 = vrot.slane %v780, 1
        %vm782 = vcmp.lt.s32.totalorder %v780, %v781
        %v783 = vsel %vm782, %v780, %v781
        %v784 = vsel %vm624, %v724, 2147483647
        %v785 = vsel %vm624, %v725, 2147483647
        %vm786 = vcmp.lt.s32.totalorder %v784, %v785
        %v787 = vsel %vm786, %v784, %v785
        %v788 = vrot.slane %v787, 4
        %vm789 = vcmp.lt.s32.totalorder %v787, %v788
        %v790 = vsel %vm789, %v787, %v788
        %v791 = vrot.slane %v790, 2
        %vm792 = vcmp.lt.s32.totalorder %v790, %v791
        %v793 = vsel %vm792, %v790, %v791
        %v794 = vrot.slane %v793, 1
        %vm795 = vcmp.lt.s32.totalorder %v793, %v794
        %v796 = vsel %vm795, %v793, %v794
        %v797 = vsel %vm624, %v726, 2147483647
        %v798 = vsel %vm624, %v727, 2147483647
        %vm799 = vcmp.lt.s32.totalorder %v797, %v798
        %v800 = vsel %vm799, %v797, %v798
        %v801 = vrot.slane %v800, 4
        %vm802 = vcmp.lt.s32.totalorder %v800, %v801
        %v803 = vsel %vm802, %v800, %v801
        %v804 = vrot.slane %v803, 2
        %vm805 = vcmp.lt.s32.totalorder %v803, %v804
        %v806 = vsel %vm805, %v803, %v804
        %v807 = vrot.slane %v806, 1
        %vm808 = vcmp.lt.s32.totalorder %v806, %v807
        %v809 = vsel %vm808, %v806, %v807
        %v810 = vsel %vm624, %v728, 2147483647
        %v811 = vsel %vm624, %v729, 2147483647
        %vm812 = vcmp.lt.s32.totalorder %v810, %v811
        %v813 = vsel %vm812, %v810, %v811
        %v814 = vrot.slane %v813, 4
        %vm815 = vcmp.lt.s32.totalorder %v813, %v814
        %v816 = vsel %vm815, %v813, %v814
        %v817 = vrot.slane %v816, 2
        %vm818 = vcmp.lt.s32.totalorder %v816, %v817
        %v819 = vsel %vm818, %v816, %v817
        %v820 = vrot.slane %v819, 1
        %vm821 = vcmp.lt.s32.totalorder %v819, %v820
        %v822 = vsel %vm821, %v819, %v820
        %v823 = vsel %vm624, %v730, 2147483647
        %v824 = vsel %vm624, %v731, 2147483647
        %vm825 = vcmp.lt.s32.totalorder %v823, %v824
        %v826 = vsel %vm825, %v823, %v824
        %v827 = vrot.slane %v826, 4
        %vm828 = vcmp.lt.s32.totalorder %v826, %v827
        %v829 = vsel %vm828, %v826, %v827
        %v830 = vrot.slane %v829, 2
        %vm831 = vcmp.lt.s32.totalorder %v829, %v830
        %v832 = vsel %vm831, %v829, %v830
        %v833 = vrot.slane %v832, 1
        %vm834 = vcmp.lt.s32.totalorder %v832, %v833
        %v835 = vsel %vm834, %v832, %v833
        %vm836 = vcmask 1041409
        %v837 = vsel %vm836, %v757, %v744
        %vm838 = vcmask 1042434
        %v839 = vsel %vm838, %v770, %v837
        %vm840 = vcmask 1043459
        %v841 = vsel %vm840, %v783, %v839
        %vm842 = vcmask 1044484
        %v843 = vsel %vm842, %v796, %v841
        %vm844 = vcmask 1045509
        %v845 = vsel %vm844, %v809, %v843
        %vm846 = vcmask 1046534
        %v847 = vsel %vm846, %v822, %v845
        %vm848 = vcmask 1047559
        %v849 = vsel %vm848, %v835, %v847
        %850 = vst.msk [vmem:[%s163] sm:$0xff] %vm624, %v849
        %s851 = sand.u32 %s93, 1
        %s852 = scalar_lea.sflag [#allocation3], %s851
        %s853 = sand.u32 %s93, 1
        %s854 = smul.addr %s853, 8
        %s855 = scalar_lea.vmem [#allocation2], %s854
        // Predicated region
        $region33: #{tpu_custom_call.1} parent=31 // pred_check
          %p856 = pneg %p103
        $region34: #{tpu_custom_call.1} parent=31 // pred_check_branch
          %858 = sbr.rel (%p856) target = $region36
        $region35: #{tpu_custom_call.1} parent=31 // pred_region
          %s860 = ssub.s32 128, 128
          %861 = vsyncadd %s852, %s860
          %s862 = smul.addr %s17, 128
          %s863 = scalar_lea.hbm %s3, %s862
          %s865 = sshll.u32 %s855, 4
          %s866 = int_to_ptr.vmem [resolvable:$true] %s865
          %868 = dma.vmem_to_hbm [thread:$0]  %s866, 128, %s863, %s852
        $region36: #{tpu_custom_call.1} parent=31 // pred_fallthru
          _
      $region32: #{tpu_custom_call.1} parent=5 // pred_fallthru
        _
      %p869 = scmp.le.s32.totalorder 2, %s12
      // Predicated region
      $region37: #{tpu_custom_call.1} parent=5 // pred_check
        %p870 = pneg %p869
      $region38: #{tpu_custom_call.1} parent=5 // pred_check_branch
        %872 = sbr.rel (%p870) target = $region40
      $region39: #{tpu_custom_call.1} parent=5 // pred_region
        %s873 = ssub.s32 %s12, 2
        // Predicated region
        $region41: #{tpu_custom_call.1} parent=39 // pred_check
          %p874 = pneg %p109
        $region42: #{tpu_custom_call.1} parent=39 // pred_check_branch
          %876 = sbr.rel (%p874) target = $region44
        $region43: #{tpu_custom_call.1} parent=39 // pred_region
          %s877 = sand.u32 %s94, 1
          %s878 = scalar_lea.sflag [#allocation3], %s877
          %s879 = sand.u32 %s94, 1
          %s880 = smul.addr %s879, 8
          %s881 = scalar_lea.vmem [#allocation2], %s880
          %882 = dma.done %s878, 128
        $region44: #{tpu_custom_call.1} parent=39 // pred_fallthru
          _
      $region40: #{tpu_custom_call.1} parent=5 // pred_fallthru
        _
    $region6: #{tpu_custom_call.1} parent=1 // loop_footer
      %s16 = sadd.s32 1, %s12
    $region7: #{tpu_custom_call.1} parent=1 // loop_footer_branch
      %11 = sbr.rel target = $region3
    $region8: #{tpu_custom_call.1} parent=1 // loop_exit
      _
    %883 = vsyncpa [#allocation3], 1
    %s884 = scalar_lea.sflag [#allocation3], 1
    %885 = vsyncpa %s884, 1

</llo_original>
